<compile_context>
chip_gen: v5e
topology: v5e:2x2
jax: 0.10.0
libtpu: 0.0.40
codegen_flags: <defaults>
</compile_context>

<pallas_src>
import jax
import jax.numpy as jnp
from jax.experimental import pallas as pl
from jax.experimental.pallas import tpu as pltpu

CLASSES = 2
FEATURE_DIM = 32
ACTION_DIM = FEATURE_DIM + CLASSES        # 34
NN_FC_DENSITY = 64
NN_HIDDEN_LAYERS = 2
STATE_DIM = FEATURE_DIM * 2               # 64

OUT_PAD = 64                              # output head padded to full 64 cols


def _mlp_kernel(x_ref, w0_ref, b0_ref, w1_ref, b1_ref, wq_ref, bq_ref, o_ref):
    # x may be streamed in bf16; upcast once in VMEM (weights are always f32).
    x = x_ref[...].astype(jnp.float32)
    # Hidden layer 0: ReLU(x @ W0 + b0) -- MXU matmul, f32 accumulation.
    h = jnp.dot(x, w0_ref[...], preferred_element_type=jnp.float32)
    h = jnp.maximum(h + b0_ref[...], 0.0)                 # bias/ReLU in f32 (VPU)
    # Hidden layer 1: ReLU(h @ W1 + b1)
    h = jnp.dot(h, w1_ref[...], preferred_element_type=jnp.float32)
    h = jnp.maximum(h + b1_ref[...], 0.0)
    # Output head (padded to OUT_PAD cols): h @ Wq + bq, no activation.
    q = jnp.dot(h, wq_ref[...], preferred_element_type=jnp.float32)
    o_ref[...] = (q + bq_ref[...]).astype(o_ref.dtype)


def prepare_params(params):
    """One-time prep: f32 weights/biases, output head zero-padded to OUT_PAD.

    Hoisted out of the forward call so no per-call XLA ops are spent on it.
    """
    wq = jnp.zeros((NN_FC_DENSITY, OUT_PAD), jnp.float32)
    wq = wq.at[:, :ACTION_DIM].set(params["wq"].astype(jnp.float32))
    bq = jnp.zeros((1, OUT_PAD), jnp.float32)
    bq = bq.at[:, :ACTION_DIM].set(params["bq"].astype(jnp.float32))
    return {
        "w0": params["w0"].astype(jnp.float32),
        "b0": params["b0"].astype(jnp.float32),
        "w1": params["w1"].astype(jnp.float32),
        "b1": params["b1"].astype(jnp.float32),
        "wq": wq,
        "bq": bq,
    }


def _choose_tb(B, tb_cap, min_steps=8):
    """Pick the batch-tile size.

    Preference: a multiple-of-8 divisor of B (no wrapper jnp.pad), small enough
    for >= min_steps grid steps (so v7x's two TensorCores each overlap several
    DMA/compute stages) but >= 256 rows so per-step overhead is amortized, and
    capped at tb_cap. Falls back to padding only for ragged batches.
    """
    b8 = max(8, ((B + 7) // 8) * 8)
    target = max(256, (B // min_steps) // 8 * 8)
    upper = max(8, min(tb_cap, target, b8))
    t = (upper // 8) * 8
    while t >= 8:
        if B % t == 0:
            return t, B, False              # exact divisor: no padding copy
        t -= 8
    tb = upper                              # ragged batch: pad up to one tile
    b_pad = ((B + tb - 1) // tb) * tb
    return tb, b_pad, True


def net_forward_padded(x, prep, *, compute_dtype=jnp.float32,
                       out_dtype=jnp.float32, tb_cap=2048):
    """Hot-path forward. x: (B, STATE_DIM).

    Returns the padded (B_pad, OUT_PAD) buffer; only columns [:ACTION_DIM]
    (and rows [:B] for ragged batches) are meaningful. Consumers should fuse
    the slice themselves -- a separate slice op would re-read the whole output
    from HBM and roughly double total traffic.
    """
    B = x.shape[0]
    tb, b_pad, ragged = _choose_tb(B, tb_cap)
    num_tiles = b_pad // tb

    xc = x.astype(compute_dtype)            # only x streams in compute_dtype
    if ragged and b_pad != B:
        xc = jnp.pad(xc, ((0, b_pad - B), (0, 0)))   # ragged tail only

    w0, b0 = prep["w0"], prep["b0"]
    w1, b1 = prep["w1"], prep["b1"]
    wq, bq = prep["wq"], prep["bq"]

    resident = lambda shape: pl.BlockSpec(shape, lambda i: (0, 0))  # VMEM-resident

    w_bytes = sum(int(v.size) * v.dtype.itemsize
                  for v in (w0, b0, w1, b1, wq, bq))
    cost = pl.CostEstimate(
        flops=2 * b_pad * (STATE_DIM * NN_FC_DENSITY
                           + NN_FC_DENSITY * NN_FC_DENSITY
                           + NN_FC_DENSITY * OUT_PAD),
        transcendentals=0,
        bytes_accessed=int(xc.size) * xc.dtype.itemsize
                       + b_pad * OUT_PAD * jnp.dtype(out_dtype).itemsize
                       + w_bytes,
    )

    return pl.pallas_call(
        _mlp_kernel,
        out_shape=jax.ShapeDtypeStruct((b_pad, OUT_PAD), out_dtype),
        grid=(num_tiles,),
        in_specs=[
            pl.BlockSpec((tb, STATE_DIM), lambda i: (i, 0)),   # streamed x tile
            resident(w0.shape), resident(b0.shape),
            resident(w1.shape), resident(b1.shape),
            resident(wq.shape), resident(bq.shape),
        ],
        out_specs=pl.BlockSpec((tb, OUT_PAD), lambda i: (i, 0)),
        compiler_params=pltpu.CompilerParams(
            dimension_semantics=("parallel",),     # megacore split on v7x
            vmem_limit_bytes=32 * 1024 * 1024,     # safe under v7x's 64 MiB
        ),
        cost_estimate=cost,
    )(xc, w0, b0, w1, b1, wq, bq)


def net_forward(x, prep, **kw):
    """Convenience/verification wrapper: slices back to (B, ACTION_DIM).

    For production use prefer net_forward_padded and fuse the slice into the
    consumer (the explicit slice here is an extra HBM copy).
    """
    out = net_forward_padded(x, prep, **kw)
    return out[:x.shape[0], :ACTION_DIM]


def init_params(key):
    """Deterministic init mirroring torch.nn.Linear (weights stored (in, out))."""
    dims = [STATE_DIM] + [NN_FC_DENSITY] * NN_HIDDEN_LAYERS + [ACTION_DIM]
    names = ["0", "1", "q"]
    params = {}
    for name, d_in, d_out in zip(names, dims[:-1], dims[1:]):
        key, kw, kb = jax.random.split(key, 3)
        bound = 1.0 / jnp.sqrt(d_in)   # torch default U(-1/sqrt(in), 1/sqrt(in))
        params[f"w{name}"] = jax.random.uniform(
            kw, (d_in, d_out), jnp.float32, -bound, bound)
        params[f"b{name}"] = jax.random.uniform(
            kb, (1, d_out), jnp.float32, -bound, bound)
    return params


def reference_forward(x, params):
    h = jnp.maximum(x @ params["w0"] + params["b0"], 0.0)
    h = jnp.maximum(h @ params["w1"] + params["b1"], 0.0)
    return h @ params["wq"] + params["bq"]


if __name__ == "__main__":
    key = jax.random.PRNGKey(0)
    key, kx = jax.random.split(key)
    params = init_params(key)
    prep = prepare_params(params)     # one-time: padded head + f32 casts

    # Main case: batch big enough to exercise the tiled, pipelined path
    # (tile=256 -> 4 grid steps, 2 per v7x TensorCore), no input padding copy.
    B = 1024
    x = jax.random.normal(kx, (B, STATE_DIM), jnp.float32)
    ref = reference_forward(x, params)

    # Hot-path padded output (no slice copy) + f32 verification via the wrapper.
    out_pad = jax.block_until_ready(net_forward_padded(x, prep))
    assert out_pad.shape == (B, OUT_PAD), out_pad.shape
    out = jax.block_until_ready(net_forward(x, prep))
    assert out.shape == (B, ACTION_DIM), out.shape
    assert jnp.allclose(out, ref, atol=1e-5, rtol=1e-5), "f32 mismatch vs reference"

    # bf16-streamed x (weights stay f32, accumulation f32): loose tolerance.
    out_bf16 = jax.block_until_ready(
        net_forward(x, prep, compute_dtype=jnp.bfloat16))
    assert out_bf16.shape == (B, ACTION_DIM), out_bf16.shape
    assert jnp.allclose(out_bf16, ref, atol=1e-1, rtol=1e-2), "bf16-x mismatch"

    # bf16 output writeback (halves the output HBM stream), f32 accumulation.
    out_bf_o = jax.block_until_ready(
        net_forward(x, prep, compute_dtype=jnp.bfloat16, out_dtype=jnp.bfloat16))
    assert out_bf_o.shape == (B, ACTION_DIM), out_bf_o.shape
    assert jnp.allclose(out_bf_o.astype(jnp.float32), ref,
                        atol=1e-1, rtol=5e-2), "bf16-out mismatch"

    # Ragged small batch: exercises the fallback padding path + 1-step grid.
    key, kx2 = jax.random.split(key)
    x_small = jax.random.normal(kx2, (7, STATE_DIM), jnp.float32)
    out_small = jax.block_until_ready(net_forward(x_small, prep))
    ref_small = reference_forward(x_small, params)
    assert out_small.shape == (7, ACTION_DIM), out_small.shape
    assert jnp.allclose(out_small, ref_small, atol=1e-5, rtol=1e-5), "ragged mismatch"

    print("KERNEL_OK")
</pallas_src>

<mosaic_0001>
module attributes {stable_mosaic.version = 11 : i64} {
  func.func @_mlp_kernel(%arg0: i32, %arg1: memref<256x64xf32, #tpu.memory_space<vmem>>, %arg2: memref<64x64xf32, #tpu.memory_space<vmem>>, %arg3: memref<1x64xf32, #tpu.memory_space<vmem>>, %arg4: memref<64x64xf32, #tpu.memory_space<vmem>>, %arg5: memref<1x64xf32, #tpu.memory_space<vmem>>, %arg6: memref<64x64xf32, #tpu.memory_space<vmem>>, %arg7: memref<1x64xf32, #tpu.memory_space<vmem>>, %arg8: memref<256x64xf32, #tpu.memory_space<vmem>>) attributes {dimension_semantics = [#tpu.dimension_semantics<parallel>], iteration_bounds = array<i64: 4>, scalar_prefetch = 0 : i64, scratch_operands = 0 : i64, tpu.core_type = #tpu.core_type<tc>, window_params = [{transform_indices = @transform_0, window_bounds = array<i64: 256, 64>}, {pipeline_mode = #tpu.pipeline_mode<synchronous>, transform_indices = @transform_1, window_bounds = array<i64: 64, 64>}, {pipeline_mode = #tpu.pipeline_mode<synchronous>, transform_indices = @transform_2, window_bounds = array<i64: 1, 64>}, {pipeline_mode = #tpu.pipeline_mode<synchronous>, transform_indices = @transform_3, window_bounds = array<i64: 64, 64>}, {pipeline_mode = #tpu.pipeline_mode<synchronous>, transform_indices = @transform_4, window_bounds = array<i64: 1, 64>}, {pipeline_mode = #tpu.pipeline_mode<synchronous>, transform_indices = @transform_5, window_bounds = array<i64: 64, 64>}, {pipeline_mode = #tpu.pipeline_mode<synchronous>, transform_indices = @transform_6, window_bounds = array<i64: 1, 64>}, {transform_indices = @transform_7, window_bounds = array<i64: 256, 64>}]} {
    %c0 = arith.constant 0 : index
    %c0_0 = arith.constant 0 : index
    %0 = vector.load %arg1[%c0, %c0_0] : memref<256x64xf32, #tpu.memory_space<vmem>>, vector<256x64xf32>
    %c0_1 = arith.constant 0 : index
    %c0_2 = arith.constant 0 : index
    %1 = vector.load %arg2[%c0_1, %c0_2] : memref<64x64xf32, #tpu.memory_space<vmem>>, vector<64x64xf32>
    %cst = arith.constant dense<0.000000e+00> : vector<256x64xf32>
    %2 = tpu.matmul %0, %1, %cst {dimension_numbers = #tpu.dot_dimension_numbers<[1], [0], [0], [1], [0, 0, 1, 1], [], []>} : vector<256x64xf32>, vector<64x64xf32>, vector<256x64xf32> -> vector<256x64xf32>
    %c0_3 = arith.constant 0 : index
    %c0_4 = arith.constant 0 : index
    %3 = vector.load %arg3[%c0_3, %c0_4] : memref<1x64xf32, #tpu.memory_space<vmem>>, vector<1x64xf32>
    %4 = vector.broadcast %3 : vector<1x64xf32> to vector<256x64xf32>
    %5 = arith.addf %2, %4 : vector<256x64xf32>
    %cst_5 = arith.constant 0.000000e+00 : f32
    %6 = vector.broadcast %cst_5 : f32 to vector<256x64xf32>
    %7 = arith.maximumf %5, %6 : vector<256x64xf32>
    %c0_6 = arith.constant 0 : index
    %c0_7 = arith.constant 0 : index
    %8 = vector.load %arg4[%c0_6, %c0_7] : memref<64x64xf32, #tpu.memory_space<vmem>>, vector<64x64xf32>
    %cst_8 = arith.constant dense<0.000000e+00> : vector<256x64xf32>
    %9 = tpu.matmul %7, %8, %cst_8 {dimension_numbers = #tpu.dot_dimension_numbers<[1], [0], [0], [1], [0, 0, 1, 1], [], []>} : vector<256x64xf32>, vector<64x64xf32>, vector<256x64xf32> -> vector<256x64xf32>
    %c0_9 = arith.constant 0 : index
    %c0_10 = arith.constant 0 : index
    %10 = vector.load %arg5[%c0_9, %c0_10] : memref<1x64xf32, #tpu.memory_space<vmem>>, vector<1x64xf32>
    %11 = vector.broadcast %10 : vector<1x64xf32> to vector<256x64xf32>
    %12 = arith.addf %9, %11 : vector<256x64xf32>
    %cst_11 = arith.constant 0.000000e+00 : f32
    %13 = vector.broadcast %cst_11 : f32 to vector<256x64xf32>
    %14 = arith.maximumf %12, %13 : vector<256x64xf32>
    %c0_12 = arith.constant 0 : index
    %c0_13 = arith.constant 0 : index
    %15 = vector.load %arg6[%c0_12, %c0_13] : memref<64x64xf32, #tpu.memory_space<vmem>>, vector<64x64xf32>
    %cst_14 = arith.constant dense<0.000000e+00> : vector<256x64xf32>
    %16 = tpu.matmul %14, %15, %cst_14 {dimension_numbers = #tpu.dot_dimension_numbers<[1], [0], [0], [1], [0, 0, 1, 1], [], []>} : vector<256x64xf32>, vector<64x64xf32>, vector<256x64xf32> -> vector<256x64xf32>
    %c0_15 = arith.constant 0 : index
    %c0_16 = arith.constant 0 : index
    %17 = vector.load %arg7[%c0_15, %c0_16] : memref<1x64xf32, #tpu.memory_space<vmem>>, vector<1x64xf32>
    %18 = vector.broadcast %17 : vector<1x64xf32> to vector<256x64xf32>
    %19 = arith.addf %16, %18 : vector<256x64xf32>
    %c0_17 = arith.constant 0 : index
    %c0_18 = arith.constant 0 : index
    %20 = vector.load %arg8[%c0_17, %c0_18] : memref<256x64xf32, #tpu.memory_space<vmem>>, vector<256x64xf32>
    tpu.vector_store %arg8[%c0_17, %c0_18], %19 {strides = array<i32>} : memref<256x64xf32, #tpu.memory_space<vmem>>, vector<256x64xf32>,
    return
  }
  func.func @transform_0(%arg0: i32) -> (i32, i32) {
    %c0_i32 = arith.constant 0 : i32
    %c0_i32_0 = arith.constant 0 : i32
    return %arg0, %c0_i32 : i32, i32
  }
  func.func @transform_1(%arg0: i32) -> (i32, i32) {
    %c0_i32 = arith.constant 0 : i32
    %c0_i32_0 = arith.constant 0 : i32
    %c0_i32_1 = arith.constant 0 : i32
    return %c0_i32, %c0_i32_0 : i32, i32
  }
  func.func @transform_2(%arg0: i32) -> (i32, i32) {
    %c0_i32 = arith.constant 0 : i32
    %c0_i32_0 = arith.constant 0 : i32
    %c0_i32_1 = arith.constant 0 : i32
    return %c0_i32, %c0_i32_0 : i32, i32
  }
  func.func @transform_3(%arg0: i32) -> (i32, i32) {
    %c0_i32 = arith.constant 0 : i32
    %c0_i32_0 = arith.constant 0 : i32
    %c0_i32_1 = arith.constant 0 : i32
    return %c0_i32, %c0_i32_0 : i32, i32
  }
  func.func @transform_4(%arg0: i32) -> (i32, i32) {
    %c0_i32 = arith.constant 0 : i32
    %c0_i32_0 = arith.constant 0 : i32
    %c0_i32_1 = arith.constant 0 : i32
    return %c0_i32, %c0_i32_0 : i32, i32
  }
  func.func @transform_5(%arg0: i32) -> (i32, i32) {
    %c0_i32 = arith.constant 0 : i32
    %c0_i32_0 = arith.constant 0 : i32
    %c0_i32_1 = arith.constant 0 : i32
    return %c0_i32, %c0_i32_0 : i32, i32
  }
  func.func @transform_6(%arg0: i32) -> (i32, i32) {
    %c0_i32 = arith.constant 0 : i32
    %c0_i32_0 = arith.constant 0 : i32
    %c0_i32_1 = arith.constant 0 : i32
    return %c0_i32, %c0_i32_0 : i32, i32
  }
  func.func @transform_7(%arg0: i32) -> (i32, i32) {
    %c0_i32 = arith.constant 0 : i32
    %c0_i32_0 = arith.constant 0 : i32
    return %arg0, %c0_i32 : i32, i32
  }
}

</mosaic_0001>

<llo_original>
// kernel: tpu_custom_call.1
$region0: #{tpu_custom_call.1}
  #allocation0 [shape = 'u32[]', space=smem, size = 0x4, offset = 0x4, fixed_abs, tag = 'smem constant byte address 0x4 - core index']
  #allocation1 [shape = 'u32[72,128]{1,0:T(1,128)}', space=vmem, size = 0x9000, scoped, tag = 'internal scratch']
  %s0 = inlined_call_operand.vmem [shape: f32[1024,64], index: 0, kind: input, shape index: {}]
  %s1 = inlined_call_operand.vmem [shape: f32[64,64], index: 1, kind: input, shape index: {}]
  %s2 = inlined_call_operand.vmem [shape: f32[1,64], index: 2, kind: input, shape index: {}]
  %s3 = inlined_call_operand.vmem [shape: f32[64,64], index: 3, kind: input, shape index: {}]
  %s4 = inlined_call_operand.vmem [shape: f32[1,64], index: 4, kind: input, shape index: {}]
  %s5 = inlined_call_operand.vmem [shape: f32[64,64], index: 5, kind: input, shape index: {}]
  %s6 = inlined_call_operand.vmem [shape: f32[1,64], index: 6, kind: input, shape index: {}]
  %s7 = inlined_call_operand.vmem [shape: f32[1024,64], index: 7, kind: output, shape index: {}]
  %s8 = sld [smem:[#allocation0]]
  $region61: #{tpu_custom_call.1} parent=0
    _
  %s10 = ssub.s32 1, %s8
  %s11 = scalar_select 0, %s10, %s8
  loop: start=0, step=1, limit=6
  $region2: #{tpu_custom_call.1} parent=0 // loop_pre_header
    _
  $region3: #{tpu_custom_call.1} parent=0 // loop_header
    %s13 = sphi 0, %s17
    %p14 = scmp.ge.s32.totalorder %s13, 6
    %s23 = sphi 0, %s25
    %s26 = sphi 0, %s23
    %s27 = sphi 0, %s26
    %s43 = sphi 0, %s27
    %s47 = sphi 0, %s47
    %s49 = sphi 0, %s47
    %s50 = sphi 0, %s49
    %s64 = sphi 0, %s50
    %s68 = sphi 0, %s68
    %s70 = sphi 0, %s68
    %s71 = sphi 0, %s70
    %s85 = sphi 0, %s71
    %s89 = sphi 0, %s89
    %s91 = sphi 0, %s89
    %s92 = sphi 0, %s91
    %s106 = sphi 0, %s92
    %s110 = sphi 0, %s110
    %s112 = sphi 0, %s110
    %s113 = sphi 0, %s112
    %s127 = sphi 0, %s113
    %s131 = sphi 0, %s131
    %s133 = sphi 0, %s131
    %s134 = sphi 0, %s133
    %s148 = sphi 0, %s134
    %s152 = sphi 0, %s152
    %s154 = sphi 0, %s152
    %s155 = sphi 0, %s154
    %s169 = sphi 0, %s155
    %s175 = sphi 0, %s177
    %s178 = sphi 0, %s175
    %s179 = sphi 0, %s178
    %s195 = sphi 0, %s179
  $region4: #{tpu_custom_call.1} parent=0 // loop_header_branch
    %16 = sbr.rel (%p14) target = $region8
  $region5: #{tpu_custom_call.1} parent=0 // loop_body
    %s18 = ssub.s32 %s13, 1
    %s19 = ssub.s32 %s13, 2
    %s20 = sadd.s32 %s13, 1
    %s21 = ssub.s32 %s13, %s20
    %p22 = scmp.eq.s32.totalorder %s21, 0
    %s24 = sadd.s32 %s23, 1
    %s25 = scalar_select %p22, %s23, %s24
    %p28 = pneg %p22
    %p29 = scmp.eq.s32.totalorder %s13, 3
    %p30 = por %p28, %p29
    %p31 = scmp.ne.s32.totalorder %s23, %s26
    %p32 = scmp.eq.s32.totalorder %s13, 0
    %p33 = por %p31, %p32
    %p34 = scmp.ne.s32.totalorder %s23, %s26
    %p35 = scmp.eq.s32.totalorder %s18, 3
    %p36 = por %p34, %p35
    %p37 = scmp.ne.s32.totalorder %s26, %s27
    %p38 = scmp.eq.s32.totalorder %s18, 0
    %p39 = por %p37, %p38
    %p40 = scmp.ne.s32.totalorder %s26, %s27
    %p41 = scmp.eq.s32.totalorder %s19, 3
    %p42 = por %p40, %p41
    %p44 = scmp.ne.s32.totalorder %s27, %s43
    %p45 = scmp.eq.s32.totalorder %s19, 0
    %p46 = por %p44, %p45
    %s48 = sadd.s32 %s47, 1
    %p51 = scmp.eq.s32.totalorder %s13, 3
    %p52 = scmp.ne.s32.totalorder %s47, %s49
    %p53 = scmp.eq.s32.totalorder %s13, 0
    %p54 = por %p52, %p53
    %p55 = scmp.ne.s32.totalorder %s47, %s49
    %p56 = scmp.eq.s32.totalorder %s18, 3
    %p57 = por %p55, %p56
    %p58 = scmp.ne.s32.totalorder %s49, %s50
    %p59 = scmp.eq.s32.totalorder %s18, 0
    %p60 = por %p58, %p59
    %p61 = scmp.ne.s32.totalorder %s49, %s50
    %p62 = scmp.eq.s32.totalorder %s19, 3
    %p63 = por %p61, %p62
    %p65 = scmp.ne.s32.totalorder %s50, %s64
    %p66 = scmp.eq.s32.totalorder %s19, 0
    %p67 = por %p65, %p66
    %s69 = sadd.s32 %s68, 1
    %p72 = scmp.eq.s32.totalorder %s13, 3
    %p73 = scmp.ne.s32.totalorder %s68, %s70
    %p74 = scmp.eq.s32.totalorder %s13, 0
    %p75 = por %p73, %p74
    %p76 = scmp.ne.s32.totalorder %s68, %s70
    %p77 = scmp.eq.s32.totalorder %s18, 3
    %p78 = por %p76, %p77
    %p79 = scmp.ne.s32.totalorder %s70, %s71
    %p80 = scmp.eq.s32.totalorder %s18, 0
    %p81 = por %p79, %p80
    %p82 = scmp.ne.s32.totalorder %s70, %s71
    %p83 = scmp.eq.s32.totalorder %s19, 3
    %p84 = por %p82, %p83
    %p86 = scmp.ne.s32.totalorder %s71, %s85
    %p87 = scmp.eq.s32.totalorder %s19, 0
    %p88 = por %p86, %p87
    %s90 = sadd.s32 %s89, 1
    %p93 = scmp.eq.s32.totalorder %s13, 3
    %p94 = scmp.ne.s32.totalorder %s89, %s91
    %p95 = scmp.eq.s32.totalorder %s13, 0
    %p96 = por %p94, %p95
    %p97 = scmp.ne.s32.totalorder %s89, %s91
    %p98 = scmp.eq.s32.totalorder %s18, 3
    %p99 = por %p97, %p98
    %p100 = scmp.ne.s32.totalorder %s91, %s92
    %p101 = scmp.eq.s32.totalorder %s18, 0
    %p102 = por %p100, %p101
    %p103 = scmp.ne.s32.totalorder %s91, %s92
    %p104 = scmp.eq.s32.totalorder %s19, 3
    %p105 = por %p103, %p104
    %p107 = scmp.ne.s32.totalorder %s92, %s106
    %p108 = scmp.eq.s32.totalorder %s19, 0
    %p109 = por %p107, %p108
    %s111 = sadd.s32 %s110, 1
    %p114 = scmp.eq.s32.totalorder %s13, 3
    %p115 = scmp.ne.s32.totalorder %s110, %s112
    %p116 = scmp.eq.s32.totalorder %s13, 0
    %p117 = por %p115, %p116
    %p118 = scmp.ne.s32.totalorder %s110, %s112
    %p119 = scmp.eq.s32.totalorder %s18, 3
    %p120 = por %p118, %p119
    %p121 = scmp.ne.s32.totalorder %s112, %s113
    %p122 = scmp.eq.s32.totalorder %s18, 0
    %p123 = por %p121, %p122
    %p124 = scmp.ne.s32.totalorder %s112, %s113
    %p125 = scmp.eq.s32.totalorder %s19, 3
    %p126 = por %p124, %p125
    %p128 = scmp.ne.s32.totalorder %s113, %s127
    %p129 = scmp.eq.s32.totalorder %s19, 0
    %p130 = por %p128, %p129
    %s132 = sadd.s32 %s131, 1
    %p135 = scmp.eq.s32.totalorder %s13, 3
    %p136 = scmp.ne.s32.totalorder %s131, %s133
    %p137 = scmp.eq.s32.totalorder %s13, 0
    %p138 = por %p136, %p137
    %p139 = scmp.ne.s32.totalorder %s131, %s133
    %p140 = scmp.eq.s32.totalorder %s18, 3
    %p141 = por %p139, %p140
    %p142 = scmp.ne.s32.totalorder %s133, %s134
    %p143 = scmp.eq.s32.totalorder %s18, 0
    %p144 = por %p142, %p143
    %p145 = scmp.ne.s32.totalorder %s133, %s134
    %p146 = scmp.eq.s32.totalorder %s19, 3
    %p147 = por %p145, %p146
    %p149 = scmp.ne.s32.totalorder %s134, %s148
    %p150 = scmp.eq.s32.totalorder %s19, 0
    %p151 = por %p149, %p150
    %s153 = sadd.s32 %s152, 1
    %p156 = scmp.eq.s32.totalorder %s13, 3
    %p157 = scmp.ne.s32.totalorder %s152, %s154
    %p158 = scmp.eq.s32.totalorder %s13, 0
    %p159 = por %p157, %p158
    %p160 = scmp.ne.s32.totalorder %s152, %s154
    %p161 = scmp.eq.s32.totalorder %s18, 3
    %p162 = por %p160, %p161
    %p163 = scmp.ne.s32.totalorder %s154, %s155
    %p164 = scmp.eq.s32.totalorder %s18, 0
    %p165 = por %p163, %p164
    %p166 = scmp.ne.s32.totalorder %s154, %s155
    %p167 = scmp.eq.s32.totalorder %s19, 3
    %p168 = por %p166, %p167
    %p170 = scmp.ne.s32.totalorder %s155, %s169
    %p171 = scmp.eq.s32.totalorder %s19, 0
    %p172 = por %p170, %p171
    %s173 = ssub.s32 %s13, %s20
    %p174 = scmp.eq.s32.totalorder %s173, 0
    %s176 = sadd.s32 %s175, 1
    %s177 = scalar_select %p174, %s175, %s176
    %p180 = pneg %p174
    %p181 = scmp.eq.s32.totalorder %s13, 3
    %p182 = por %p180, %p181
    %p183 = scmp.ne.s32.totalorder %s175, %s178
    %p184 = scmp.eq.s32.totalorder %s13, 0
    %p185 = por %p183, %p184
    %p186 = scmp.ne.s32.totalorder %s175, %s178
    %p187 = scmp.eq.s32.totalorder %s18, 3
    %p188 = por %p186, %p187
    %p189 = scmp.ne.s32.totalorder %s178, %s179
    %p190 = scmp.eq.s32.totalorder %s18, 0
    %p191 = por %p189, %p190
    %p192 = scmp.ne.s32.totalorder %s178, %s179
    %p193 = scmp.eq.s32.totalorder %s19, 3
    %p194 = por %p192, %p193
    %p196 = scmp.ne.s32.totalorder %s179, %s195
    %p197 = scmp.eq.s32.totalorder %s19, 0
    %p198 = por %p196, %p197
    %p199 = scmp.le.s32.totalorder 1, %s13
    %p200 = scmp.lt.s32.totalorder %s13, 5
    %p201 = pnand %p199, %p200
    %p202 = pneg %p201
    // Predicated region
    $region9: #{tpu_custom_call.1} parent=5 // pred_check
      _
    $region10: #{tpu_custom_call.1} parent=5 // pred_check_branch
      %204 = sbr.rel (%p201) target = $region12
    $region11: #{tpu_custom_call.1} parent=5 // pred_region
      %s205 = ssub.s32 %s13, 1
      // Predicated region
      $region13: #{tpu_custom_call.1} parent=11 // pred_check
        %p206 = pneg %p60
      $region14: #{tpu_custom_call.1} parent=11 // pred_check_branch
        %208 = sbr.rel (%p206) target = $region16
      $region15: #{tpu_custom_call.1} parent=11 // pred_region
        _
      $region16: #{tpu_custom_call.1} parent=11 // pred_fallthru
        _
      // Predicated region
      $region17: #{tpu_custom_call.1} parent=11 // pred_check
        %p209 = pneg %p81
      $region18: #{tpu_custom_call.1} parent=11 // pred_check_branch
        %211 = sbr.rel (%p209) target = $region20
      $region19: #{tpu_custom_call.1} parent=11 // pred_region
        _
      $region20: #{tpu_custom_call.1} parent=11 // pred_fallthru
        _
      // Predicated region
      $region21: #{tpu_custom_call.1} parent=11 // pred_check
        %p212 = pneg %p102
      $region22: #{tpu_custom_call.1} parent=11 // pred_check_branch
        %214 = sbr.rel (%p212) target = $region24
      $region23: #{tpu_custom_call.1} parent=11 // pred_region
        _
      $region24: #{tpu_custom_call.1} parent=11 // pred_fallthru
        _
      // Predicated region
      $region25: #{tpu_custom_call.1} parent=11 // pred_check
        %p215 = pneg %p123
      $region26: #{tpu_custom_call.1} parent=11 // pred_check_branch
        %217 = sbr.rel (%p215) target = $region28
      $region27: #{tpu_custom_call.1} parent=11 // pred_region
        _
      $region28: #{tpu_custom_call.1} parent=11 // pred_fallthru
        _
      // Predicated region
      $region29: #{tpu_custom_call.1} parent=11 // pred_check
        %p218 = pneg %p144
      $region30: #{tpu_custom_call.1} parent=11 // pred_check_branch
        %220 = sbr.rel (%p218) target = $region32
      $region31: #{tpu_custom_call.1} parent=11 // pred_region
        _
      $region32: #{tpu_custom_call.1} parent=11 // pred_fallthru
        _
      // Predicated region
      $region33: #{tpu_custom_call.1} parent=11 // pred_check
        %p221 = pneg %p165
      $region34: #{tpu_custom_call.1} parent=11 // pred_check_branch
        %223 = sbr.rel (%p221) target = $region36
      $region35: #{tpu_custom_call.1} parent=11 // pred_region
        _
      $region36: #{tpu_custom_call.1} parent=11 // pred_fallthru
        _
    $region12: #{tpu_custom_call.1} parent=5 // pred_fallthru
      _
    %p224 = scmp.lt.s32.totalorder %s13, 4
    // Predicated region
    $region37: #{tpu_custom_call.1} parent=5 // pred_check
      %p225 = pneg %p224
    $region38: #{tpu_custom_call.1} parent=5 // pred_check_branch
      %227 = sbr.rel (%p225) target = $region40
    $region39: #{tpu_custom_call.1} parent=5 // pred_region
      // Predicated region
      $region41: #{tpu_custom_call.1} parent=39 // pred_check
        %p228 = pneg %p33
      $region42: #{tpu_custom_call.1} parent=39 // pred_check_branch
        %230 = sbr.rel (%p228) target = $region44
      $region43: #{tpu_custom_call.1} parent=39 // pred_region
        %s231 = smul.u32 32, %s13
        %p232 = scmp.lt.s32.totalorder %s231, 127
        %s233 = scalar_select %p232, %s231, 127
        %s234 = smul.addr %s233, 8
        %s235 = scalar_lea.vmem %s0, %s234
        %s236 = smul.u32 32, %s13
      $region44: #{tpu_custom_call.1} parent=39 // pred_fallthru
        _
    $region40: #{tpu_custom_call.1} parent=5 // pred_fallthru
      _
    %p237 = scmp.le.s32.totalorder 1, %s13
    %p238 = scmp.lt.s32.totalorder %s13, 5
    %p239 = pnand %p237, %p238
    %p240 = pneg %p239
    // Predicated region
    $region45: #{tpu_custom_call.1} parent=5 // pred_check
      _
    $region46: #{tpu_custom_call.1} parent=5 // pred_check_branch
      %242 = sbr.rel (%p239) target = $region48
    $region47: #{tpu_custom_call.1} parent=5 // pred_region
      %s243 = ssub.s32 %s13, 1
      %s244 = smul.u32 32, %s18
      %p245 = scmp.lt.s32.totalorder %s244, 127
      %s246 = scalar_select %p245, %s244, 127
      %s247 = smul.addr %s246, 8
      %s248 = scalar_lea.vmem %s0, %s247
      %p249 = pneg %p39
      %p250 = pneg %p36
      %p251 = pneg %p60
      %p252 = pneg %p57
      %p253 = pneg %p81
      %p254 = pneg %p78
      %p255 = pneg %p102
      %p256 = pneg %p99
      %p257 = pneg %p123
      %p258 = pneg %p120
      %p259 = pneg %p144
      %p260 = pneg %p141
      %p261 = pneg %p165
      %p262 = pneg %p162
      %p263 = pneg %p191
      %p264 = pneg %p188
      %s265 = smul.u32 32, %s18
      %p266 = scmp.lt.s32.totalorder %s265, 127
      %s267 = scalar_select %p266, %s265, 127
      %s268 = smul.addr %s267, 8
      %s269 = scalar_lea.vmem %s7, %s268
      %s270 = smul.u32 32, %s18
      %p271 = scmp.lt.s32.totalorder %s270, 127
      %s272 = scalar_select %p271, %s270, 127
      %s273 = smul.addr %s272, 8
      %s274 = scalar_lea.vmem %s0, %s273
      %s275 = smul.u32 32, %s18
      %s276 = smul.u32 32, %s18
      %p277 = scmp.lt.s32.totalorder %s276, 127
      %s278 = scalar_select %p277, %s276, 127
      %s279 = smul.addr %s278, 8
      %s280 = scalar_lea.vmem %s7, %s279
      %s281 = smul.u32 32, %s18
      %v282 = vld [vmem:[%s274] sm:$0xff]
      %v283 = vld [vmem:[%s274 + $0x8] sm:$0xff]
      %v284 = vld [vmem:[%s274 + $0x10] sm:$0xff]
      %v285 = vld [vmem:[%s274 + $0x18] sm:$0xff]
      %v286 = vld [vmem:[%s274 + $0x20] sm:$0xff]
      %v287 = vld [vmem:[%s274 + $0x28] sm:$0xff]
      %v288 = vld [vmem:[%s274 + $0x30] sm:$0xff]
      %v289 = vld [vmem:[%s274 + $0x38] sm:$0xff]
      %v290 = vld [vmem:[%s274 + $0x40] sm:$0xff]
      %v291 = vld [vmem:[%s274 + $0x48] sm:$0xff]
      %v292 = vld [vmem:[%s274 + $0x50] sm:$0xff]
      %v293 = vld [vmem:[%s274 + $0x58] sm:$0xff]
      %v294 = vld [vmem:[%s274 + $0x60] sm:$0xff]
      %v295 = vld [vmem:[%s274 + $0x68] sm:$0xff]
      %v296 = vld [vmem:[%s274 + $0x70] sm:$0xff]
      %v297 = vld [vmem:[%s274 + $0x78] sm:$0xff]
      %v298 = vld [vmem:[%s274 + $0x80] sm:$0xff]
      %v299 = vld [vmem:[%s274 + $0x88] sm:$0xff]
      %v300 = vld [vmem:[%s274 + $0x90] sm:$0xff]
      %v301 = vld [vmem:[%s274 + $0x98] sm:$0xff]
      %v302 = vld [vmem:[%s274 + $0xa0] sm:$0xff]
      %v303 = vld [vmem:[%s274 + $0xa8] sm:$0xff]
      %v304 = vld [vmem:[%s274 + $0xb0] sm:$0xff]
      %v305 = vld [vmem:[%s274 + $0xb8] sm:$0xff]
      %v306 = vld [vmem:[%s274 + $0xc0] sm:$0xff]
      %v307 = vld [vmem:[%s274 + $0xc8] sm:$0xff]
      %v308 = vld [vmem:[%s274 + $0xd0] sm:$0xff]
      %v309 = vld [vmem:[%s274 + $0xd8] sm:$0xff]
      %v310 = vld [vmem:[%s274 + $0xe0] sm:$0xff]
      %v311 = vld [vmem:[%s274 + $0xe8] sm:$0xff]
      %v312 = vld [vmem:[%s274 + $0xf0] sm:$0xff]
      %v313 = vld [vmem:[%s274 + $0xf8] sm:$0xff]
      %v314 = vld [vmem:[%s1] sm:$0xff]
      %v315 = vld [vmem:[%s1 + $0x8] sm:$0xff]
      %v316 = vld [vmem:[%s1 + $0x10] sm:$0xff]
      %v317 = vld [vmem:[%s1 + $0x18] sm:$0xff]
      %v318 = vld [vmem:[%s1 + $0x20] sm:$0xff]
      %v319 = vld [vmem:[%s1 + $0x28] sm:$0xff]
      %v320 = vld [vmem:[%s1 + $0x30] sm:$0xff]
      %v321 = vld [vmem:[%s1 + $0x38] sm:$0xff]
      %v322 = vld [vmem:[%s2] sm:$0x1]
      %v324 = vperm.slane %v322, 0
      %vm326 = vcmask 523264
      %v328 = vsel %vm326, %v282, 0
      %v331 = vsel %vm326, %v283, 0
      %v334 = vsel %vm326, %v284, 0
      %v337 = vsel %vm326, %v285, 0
      %v340 = vsel %vm326, %v286, 0
      %v343 = vsel %vm326, %v287, 0
      %v346 = vsel %vm326, %v288, 0
      %v349 = vsel %vm326, %v289, 0
      %v352 = vsel %vm326, %v290, 0
      %v355 = vsel %vm326, %v291, 0
      %v358 = vsel %vm326, %v292, 0
      %v361 = vsel %vm326, %v293, 0
      %v364 = vsel %vm326, %v294, 0
      %v367 = vsel %vm326, %v295, 0
      %v370 = vsel %vm326, %v296, 0
      %v373 = vsel %vm326, %v297, 0
      %v376 = vsel %vm326, %v298, 0
      %v379 = vsel %vm326, %v299, 0
      %v382 = vsel %vm326, %v300, 0
      %v385 = vsel %vm326, %v301, 0
      %v388 = vsel %vm326, %v302, 0
      %v391 = vsel %vm326, %v303, 0
      %v394 = vsel %vm326, %v304, 0
      %v397 = vsel %vm326, %v305, 0
      %v400 = vsel %vm326, %v306, 0
      %v403 = vsel %vm326, %v307, 0
      %v406 = vsel %vm326, %v308, 0
      %v409 = vsel %vm326, %v309, 0
      %v412 = vsel %vm326, %v310, 0
      %v415 = vsel %vm326, %v311, 0
      %v418 = vsel %vm326, %v312, 0
      %v421 = vsel %vm326, %v313, 0
      %423 = vmatpush.msra.mxu0 0.0
      %424 = vmatpush.msra.mxu0 0.0
      %425 = vmatpush.msra.mxu0 0.0
      %426 = vmatpush.msra.mxu0 0.0
      %427 = vmatpush.msra.mxu0 0.0
      %428 = vmatpush.msra.mxu0 0.0
      %429 = vmatpush.msra.mxu0 0.0
      %430 = vmatpush.msra.mxu0 0.0
      %431 = vmatpush.msra.mxu0 %v321
      %432 = vmatpush.msra.mxu0 %v320
      %433 = vmatpush.msra.mxu0 %v319
      %434 = vmatpush.msra.mxu0 %v318
      %435 = vmatpush.msra.mxu0 %v317
      %436 = vmatpush.msra.mxu0 %v316
      %437 = vmatpush.msra.mxu0 %v315
      %438 = vmatpush.msra.mxu0 %v314
      %439 = vmatmul.f32.gmra.mxu0 %v328
      %v440 = vpop.f32.mrf.mxu0
      %v441 = vadd.f32 %v324, %v440
      %442 = vmatmul.f32.gmra.mxu0 %v331
      %v443 = vpop.f32.mrf.mxu0
      %v444 = vadd.f32 %v324, %v443
      %445 = vmatmul.f32.gmra.mxu0 %v334
      %v446 = vpop.f32.mrf.mxu0
      %v447 = vadd.f32 %v324, %v446
      %448 = vmatmul.f32.gmra.mxu0 %v337
      %v449 = vpop.f32.mrf.mxu0
      %v450 = vadd.f32 %v324, %v449
      %451 = vmatmul.f32.gmra.mxu0 %v340
      %v452 = vpop.f32.mrf.mxu0
      %v453 = vadd.f32 %v324, %v452
      %454 = vmatmul.f32.gmra.mxu0 %v343
      %v455 = vpop.f32.mrf.mxu0
      %v456 = vadd.f32 %v324, %v455
      %457 = vmatmul.f32.gmra.mxu0 %v346
      %v458 = vpop.f32.mrf.mxu0
      %v459 = vadd.f32 %v324, %v458
      %460 = vmatmul.f32.gmra.mxu0 %v349
      %v461 = vpop.f32.mrf.mxu0
      %v462 = vadd.f32 %v324, %v461
      %463 = vmatmul.f32.gmra.mxu0 %v352
      %v464 = vpop.f32.mrf.mxu0
      %v465 = vadd.f32 %v324, %v464
      %466 = vmatmul.f32.gmra.mxu0 %v355
      %v467 = vpop.f32.mrf.mxu0
      %v468 = vadd.f32 %v324, %v467
      %469 = vmatmul.f32.gmra.mxu0 %v358
      %v470 = vpop.f32.mrf.mxu0
      %v471 = vadd.f32 %v324, %v470
      %472 = vmatmul.f32.gmra.mxu0 %v361
      %v473 = vpop.f32.mrf.mxu0
      %v474 = vadd.f32 %v324, %v473
      %475 = vmatmul.f32.gmra.mxu0 %v364
      %v476 = vpop.f32.mrf.mxu0
      %v477 = vadd.f32 %v324, %v476
      %478 = vmatmul.f32.gmra.mxu0 %v367
      %v479 = vpop.f32.mrf.mxu0
      %v480 = vadd.f32 %v324, %v479
      %481 = vmatmul.f32.gmra.mxu0 %v370
      %v482 = vpop.f32.mrf.mxu0
      %v483 = vadd.f32 %v324, %v482
      %484 = vmatmul.f32.gmra.mxu0 %v373
      %v485 = vpop.f32.mrf.mxu0
      %v486 = vadd.f32 %v324, %v485
      %487 = vmatmul.f32.gmra.mxu0 %v376
      %v488 = vpop.f32.mrf.mxu0
      %v489 = vadd.f32 %v324, %v488
      %490 = vmatmul.f32.gmra.mxu0 %v379
      %v491 = vpop.f32.mrf.mxu0
      %v492 = vadd.f32 %v324, %v491
      %493 = vmatmul.f32.gmra.mxu0 %v382
      %v494 = vpop.f32.mrf.mxu0
      %v495 = vadd.f32 %v324, %v494
      %496 = vmatmul.f32.gmra.mxu0 %v385
      %v497 = vpop.f32.mrf.mxu0
      %v498 = vadd.f32 %v324, %v497
      %499 = vmatmul.f32.gmra.mxu0 %v388
      %v500 = vpop.f32.mrf.mxu0
      %v501 = vadd.f32 %v324, %v500
      %502 = vmatmul.f32.gmra.mxu0 %v391
      %v503 = vpop.f32.mrf.mxu0
      %v504 = vadd.f32 %v324, %v503
      %505 = vmatmul.f32.gmra.mxu0 %v394
      %v506 = vpop.f32.mrf.mxu0
      %v507 = vadd.f32 %v324, %v506
      %508 = vmatmul.f32.gmra.mxu0 %v397
      %v509 = vpop.f32.mrf.mxu0
      %v510 = vadd.f32 %v324, %v509
      %511 = vmatmul.f32.gmra.mxu0 %v400
      %v512 = vpop.f32.mrf.mxu0
      %v513 = vadd.f32 %v324, %v512
      %514 = vmatmul.f32.gmra.mxu0 %v403
      %v515 = vpop.f32.mrf.mxu0
      %v516 = vadd.f32 %v324, %v515
      %517 = vmatmul.f32.gmra.mxu0 %v406
      %v518 = vpop.f32.mrf.mxu0
      %v519 = vadd.f32 %v324, %v518
      %520 = vmatmul.f32.gmra.mxu0 %v409
      %v521 = vpop.f32.mrf.mxu0
      %v522 = vadd.f32 %v324, %v521
      %523 = vmatmul.f32.gmra.mxu0 %v412
      %v524 = vpop.f32.mrf.mxu0
      %v525 = vadd.f32 %v324, %v524
      %526 = vmatmul.f32.gmra.mxu0 %v415
      %v527 = vpop.f32.mrf.mxu0
      %v528 = vadd.f32 %v324, %v527
      %529 = vmatmul.f32.gmra.mxu0 %v418
      %v530 = vpop.f32.mrf.mxu0
      %v531 = vadd.f32 %v324, %v530
      %532 = vmatmul.f32.gmra.mxu0 %v421
      %v533 = vpop.f32.mrf.mxu0
      %v534 = vadd.f32 %v324, %v533
      %535 = vdwg.mxu0
      %v536 = vmax.f32 %v441, 0.0
      %v537 = vmax.f32 %v444, 0.0
      %v538 = vmax.f32 %v447, 0.0
      %v539 = vmax.f32 %v450, 0.0
      %v540 = vmax.f32 %v453, 0.0
      %v541 = vmax.f32 %v456, 0.0
      %v542 = vmax.f32 %v459, 0.0
      %v543 = vmax.f32 %v462, 0.0
      %v544 = vmax.f32 %v465, 0.0
      %v545 = vmax.f32 %v468, 0.0
      %v546 = vmax.f32 %v471, 0.0
      %v547 = vmax.f32 %v474, 0.0
      %v548 = vmax.f32 %v477, 0.0
      %v549 = vmax.f32 %v480, 0.0
      %v550 = vmax.f32 %v483, 0.0
      %v551 = vmax.f32 %v486, 0.0
      %v552 = vmax.f32 %v489, 0.0
      %v553 = vmax.f32 %v492, 0.0
      %v554 = vmax.f32 %v495, 0.0
      %v555 = vmax.f32 %v498, 0.0
      %v556 = vmax.f32 %v501, 0.0
      %v557 = vmax.f32 %v504, 0.0
      %v558 = vmax.f32 %v507, 0.0
      %v559 = vmax.f32 %v510, 0.0
      %v560 = vmax.f32 %v513, 0.0
      %v561 = vmax.f32 %v516, 0.0
      %v562 = vmax.f32 %v519, 0.0
      %v563 = vmax.f32 %v522, 0.0
      %v564 = vmax.f32 %v525, 0.0
      %v565 = vmax.f32 %v528, 0.0
      %v566 = vmax.f32 %v531, 0.0
      %v567 = vmax.f32 %v534, 0.0
      %v568 = vld [vmem:[%s3] sm:$0xff]
      %v569 = vld [vmem:[%s3 + $0x8] sm:$0xff]
      %v570 = vld [vmem:[%s3 + $0x10] sm:$0xff]
      %v571 = vld [vmem:[%s3 + $0x18] sm:$0xff]
      %v572 = vld [vmem:[%s3 + $0x20] sm:$0xff]
      %v573 = vld [vmem:[%s3 + $0x28] sm:$0xff]
      %v574 = vld [vmem:[%s3 + $0x30] sm:$0xff]
      %v575 = vld [vmem:[%s3 + $0x38] sm:$0xff]
      %v576 = vld [vmem:[%s4] sm:$0x1]
      %v578 = vperm.slane %v576, 0
      %v581 = vsel %vm326, %v536, 0
      %v584 = vsel %vm326, %v537, 0
      %v587 = vsel %vm326, %v538, 0
      %v590 = vsel %vm326, %v539, 0
      %v593 = vsel %vm326, %v540, 0
      %v596 = vsel %vm326, %v541, 0
      %v599 = vsel %vm326, %v542, 0
      %v602 = vsel %vm326, %v543, 0
      %v605 = vsel %vm326, %v544, 0
      %v608 = vsel %vm326, %v545, 0
      %v611 = vsel %vm326, %v546, 0
      %v614 = vsel %vm326, %v547, 0
      %v617 = vsel %vm326, %v548, 0
      %v620 = vsel %vm326, %v549, 0
      %v623 = vsel %vm326, %v550, 0
      %v626 = vsel %vm326, %v551, 0
      %v629 = vsel %vm326, %v552, 0
      %v632 = vsel %vm326, %v553, 0
      %v635 = vsel %vm326, %v554, 0
      %v638 = vsel %vm326, %v555, 0
      %v641 = vsel %vm326, %v556, 0
      %v644 = vsel %vm326, %v557, 0
      %v647 = vsel %vm326, %v558, 0
      %v650 = vsel %vm326, %v559, 0
      %v653 = vsel %vm326, %v560, 0
      %v656 = vsel %vm326, %v561, 0
      %v659 = vsel %vm326, %v562, 0
      %v662 = vsel %vm326, %v563, 0
      %v665 = vsel %vm326, %v564, 0
      %v668 = vsel %vm326, %v565, 0
      %v671 = vsel %vm326, %v566, 0
      %v674 = vsel %vm326, %v567, 0
      %676 = vmatpush.msra.mxu0 0.0
      %677 = vmatpush.msra.mxu0 0.0
      %678 = vmatpush.msra.mxu0 0.0
      %679 = vmatpush.msra.mxu0 0.0
      %680 = vmatpush.msra.mxu0 0.0
      %681 = vmatpush.msra.mxu0 0.0
      %682 = vmatpush.msra.mxu0 0.0
      %683 = vmatpush.msra.mxu0 0.0
      %684 = vmatpush.msra.mxu0 %v575
      %685 = vmatpush.msra.mxu0 %v574
      %686 = vmatpush.msra.mxu0 %v573
      %687 = vmatpush.msra.mxu0 %v572
      %688 = vmatpush.msra.mxu0 %v571
      %689 = vmatpush.msra.mxu0 %v570
      %690 = vmatpush.msra.mxu0 %v569
      %691 = vmatpush.msra.mxu0 %v568
      %692 = vmatmul.f32.gmra.mxu0 %v581
      %v693 = vpop.f32.mrf.mxu0
      %v694 = vadd.f32 %v578, %v693
      %695 = vmatmul.f32.gmra.mxu0 %v584
      %v696 = vpop.f32.mrf.mxu0
      %v697 = vadd.f32 %v578, %v696
      %698 = vmatmul.f32.gmra.mxu0 %v587
      %v699 = vpop.f32.mrf.mxu0
      %v700 = vadd.f32 %v578, %v699
      %701 = vmatmul.f32.gmra.mxu0 %v590
      %v702 = vpop.f32.mrf.mxu0
      %v703 = vadd.f32 %v578, %v702
      %704 = vmatmul.f32.gmra.mxu0 %v593
      %v705 = vpop.f32.mrf.mxu0
      %v706 = vadd.f32 %v578, %v705
      %707 = vmatmul.f32.gmra.mxu0 %v596
      %v708 = vpop.f32.mrf.mxu0
      %v709 = vadd.f32 %v578, %v708
      %710 = vmatmul.f32.gmra.mxu0 %v599
      %v711 = vpop.f32.mrf.mxu0
      %v712 = vadd.f32 %v578, %v711
      %713 = vmatmul.f32.gmra.mxu0 %v602
      %v714 = vpop.f32.mrf.mxu0
      %v715 = vadd.f32 %v578, %v714
      %716 = vmatmul.f32.gmra.mxu0 %v605
      %v717 = vpop.f32.mrf.mxu0
      %v718 = vadd.f32 %v578, %v717
      %719 = vmatmul.f32.gmra.mxu0 %v608
      %v720 = vpop.f32.mrf.mxu0
      %v721 = vadd.f32 %v578, %v720
      %722 = vmatmul.f32.gmra.mxu0 %v611
      %v723 = vpop.f32.mrf.mxu0
      %v724 = vadd.f32 %v578, %v723
      %725 = vmatmul.f32.gmra.mxu0 %v614
      %v726 = vpop.f32.mrf.mxu0
      %v727 = vadd.f32 %v578, %v726
      %728 = vmatmul.f32.gmra.mxu0 %v617
      %v729 = vpop.f32.mrf.mxu0
      %v730 = vadd.f32 %v578, %v729
      %731 = vmatmul.f32.gmra.mxu0 %v620
      %v732 = vpop.f32.mrf.mxu0
      %v733 = vadd.f32 %v578, %v732
      %734 = vmatmul.f32.gmra.mxu0 %v623
      %v735 = vpop.f32.mrf.mxu0
      %v736 = vadd.f32 %v578, %v735
      %737 = vmatmul.f32.gmra.mxu0 %v626
      %v738 = vpop.f32.mrf.mxu0
      %v739 = vadd.f32 %v578, %v738
      %740 = vmatmul.f32.gmra.mxu0 %v629
      %v741 = vpop.f32.mrf.mxu0
      %v742 = vadd.f32 %v578, %v741
      %743 = vmatmul.f32.gmra.mxu0 %v632
      %v744 = vpop.f32.mrf.mxu0
      %v745 = vadd.f32 %v578, %v744
      %746 = vmatmul.f32.gmra.mxu0 %v635
      %v747 = vpop.f32.mrf.mxu0
      %v748 = vadd.f32 %v578, %v747
      %749 = vmatmul.f32.gmra.mxu0 %v638
      %v750 = vpop.f32.mrf.mxu0
      %v751 = vadd.f32 %v578, %v750
      %752 = vmatmul.f32.gmra.mxu0 %v641
      %v753 = vpop.f32.mrf.mxu0
      %v754 = vadd.f32 %v578, %v753
      %755 = vmatmul.f32.gmra.mxu0 %v644
      %v756 = vpop.f32.mrf.mxu0
      %v757 = vadd.f32 %v578, %v756
      %758 = vmatmul.f32.gmra.mxu0 %v647
      %v759 = vpop.f32.mrf.mxu0
      %v760 = vadd.f32 %v578, %v759
      %761 = vmatmul.f32.gmra.mxu0 %v650
      %v762 = vpop.f32.mrf.mxu0
      %v763 = vadd.f32 %v578, %v762
      %764 = vmatmul.f32.gmra.mxu0 %v653
      %v765 = vpop.f32.mrf.mxu0
      %v766 = vadd.f32 %v578, %v765
      %767 = vmatmul.f32.gmra.mxu0 %v656
      %v768 = vpop.f32.mrf.mxu0
      %v769 = vadd.f32 %v578, %v768
      %770 = vmatmul.f32.gmra.mxu0 %v659
      %v771 = vpop.f32.mrf.mxu0
      %v772 = vadd.f32 %v578, %v771
      %773 = vmatmul.f32.gmra.mxu0 %v662
      %v774 = vpop.f32.mrf.mxu0
      %v775 = vadd.f32 %v578, %v774
      %776 = vmatmul.f32.gmra.mxu0 %v665
      %v777 = vpop.f32.mrf.mxu0
      %v778 = vadd.f32 %v578, %v777
      %779 = vmatmul.f32.gmra.mxu0 %v668
      %v780 = vpop.f32.mrf.mxu0
      %v781 = vadd.f32 %v578, %v780
      %782 = vmatmul.f32.gmra.mxu0 %v671
      %v783 = vpop.f32.mrf.mxu0
      %v784 = vadd.f32 %v578, %v783
      %785 = vmatmul.f32.gmra.mxu0 %v674
      %v786 = vpop.f32.mrf.mxu0
      %v787 = vadd.f32 %v578, %v786
      %788 = vdwg.mxu0
      %v789 = vmax.f32 %v694, 0.0
      %v790 = vmax.f32 %v697, 0.0
      %v791 = vmax.f32 %v700, 0.0
      %v792 = vmax.f32 %v703, 0.0
      %v793 = vmax.f32 %v706, 0.0
      %v794 = vmax.f32 %v709, 0.0
      %v795 = vmax.f32 %v712, 0.0
      %v796 = vmax.f32 %v715, 0.0
      %v797 = vmax.f32 %v718, 0.0
      %v798 = vmax.f32 %v721, 0.0
      %v799 = vmax.f32 %v724, 0.0
      %v800 = vmax.f32 %v727, 0.0
      %v801 = vmax.f32 %v730, 0.0
      %v802 = vmax.f32 %v733, 0.0
      %v803 = vmax.f32 %v736, 0.0
      %v804 = vmax.f32 %v739, 0.0
      %v805 = vmax.f32 %v742, 0.0
      %v806 = vmax.f32 %v745, 0.0
      %v807 = vmax.f32 %v748, 0.0
      %v808 = vmax.f32 %v751, 0.0
      %v809 = vmax.f32 %v754, 0.0
      %v810 = vmax.f32 %v757, 0.0
      %v811 = vmax.f32 %v760, 0.0
      %v812 = vmax.f32 %v763, 0.0
      %v813 = vmax.f32 %v766, 0.0
      %v814 = vmax.f32 %v769, 0.0
      %v815 = vmax.f32 %v772, 0.0
      %v816 = vmax.f32 %v775, 0.0
      %v817 = vmax.f32 %v778, 0.0
      %v818 = vmax.f32 %v781, 0.0
      %v819 = vmax.f32 %v784, 0.0
      %v820 = vmax.f32 %v787, 0.0
      %v821 = vld [vmem:[%s5] sm:$0xff]
      %v822 = vld [vmem:[%s5 + $0x8] sm:$0xff]
      %v823 = vld [vmem:[%s5 + $0x10] sm:$0xff]
      %v824 = vld [vmem:[%s5 + $0x18] sm:$0xff]
      %v825 = vld [vmem:[%s5 + $0x20] sm:$0xff]
      %v826 = vld [vmem:[%s5 + $0x28] sm:$0xff]
      %v827 = vld [vmem:[%s5 + $0x30] sm:$0xff]
      %v828 = vld [vmem:[%s5 + $0x38] sm:$0xff]
      %v829 = vld [vmem:[%s6] sm:$0x1]
      %v831 = vperm.slane %v829, 0
      %v834 = vsel %vm326, %v789, 0
      %v837 = vsel %vm326, %v790, 0
      %v840 = vsel %vm326, %v791, 0
      %v843 = vsel %vm326, %v792, 0
      %v846 = vsel %vm326, %v793, 0
      %v849 = vsel %vm326, %v794, 0
      %v852 = vsel %vm326, %v795, 0
      %v855 = vsel %vm326, %v796, 0
      %v858 = vsel %vm326, %v797, 0
      %v861 = vsel %vm326, %v798, 0
      %v864 = vsel %vm326, %v799, 0
      %v867 = vsel %vm326, %v800, 0
      %v870 = vsel %vm326, %v801, 0
      %v873 = vsel %vm326, %v802, 0
      %v876 = vsel %vm326, %v803, 0
      %v879 = vsel %vm326, %v804, 0
      %v882 = vsel %vm326, %v805, 0
      %v885 = vsel %vm326, %v806, 0
      %v888 = vsel %vm326, %v807, 0
      %v891 = vsel %vm326, %v808, 0
      %v894 = vsel %vm326, %v809, 0
      %v897 = vsel %vm326, %v810, 0
      %v900 = vsel %vm326, %v811, 0
      %v903 = vsel %vm326, %v812, 0
      %v906 = vsel %vm326, %v813, 0
      %v909 = vsel %vm326, %v814, 0
      %v912 = vsel %vm326, %v815, 0
      %v915 = vsel %vm326, %v816, 0
      %v918 = vsel %vm326, %v817, 0
      %v921 = vsel %vm326, %v818, 0
      %v924 = vsel %vm326, %v819, 0
      %v927 = vsel %vm326, %v820, 0
      %929 = vmatpush.msra.mxu0 0.0
      %930 = vmatpush.msra.mxu0 0.0
      %931 = vmatpush.msra.mxu0 0.0
      %932 = vmatpush.msra.mxu0 0.0
      %933 = vmatpush.msra.mxu0 0.0
      %934 = vmatpush.msra.mxu0 0.0
      %935 = vmatpush.msra.mxu0 0.0
      %936 = vmatpush.msra.mxu0 0.0
      %937 = vmatpush.msra.mxu0 %v828
      %938 = vmatpush.msra.mxu0 %v827
      %939 = vmatpush.msra.mxu0 %v826
      %940 = vmatpush.msra.mxu0 %v825
      %941 = vmatpush.msra.mxu0 %v824
      %942 = vmatpush.msra.mxu0 %v823
      %943 = vmatpush.msra.mxu0 %v822
      %944 = vmatpush.msra.mxu0 %v821
      %945 = vmatmul.f32.gmra.mxu0 %v834
      %v946 = vpop.f32.mrf.mxu0
      %v947 = vadd.f32 %v831, %v946
      %948 = vmatmul.f32.gmra.mxu0 %v837
      %v949 = vpop.f32.mrf.mxu0
      %v950 = vadd.f32 %v831, %v949
      %951 = vmatmul.f32.gmra.mxu0 %v840
      %v952 = vpop.f32.mrf.mxu0
      %v953 = vadd.f32 %v831, %v952
      %954 = vmatmul.f32.gmra.mxu0 %v843
      %v955 = vpop.f32.mrf.mxu0
      %v956 = vadd.f32 %v831, %v955
      %957 = vmatmul.f32.gmra.mxu0 %v846
      %v958 = vpop.f32.mrf.mxu0
      %v959 = vadd.f32 %v831, %v958
      %960 = vmatmul.f32.gmra.mxu0 %v849
      %v961 = vpop.f32.mrf.mxu0
      %v962 = vadd.f32 %v831, %v961
      %963 = vmatmul.f32.gmra.mxu0 %v852
      %v964 = vpop.f32.mrf.mxu0
      %v965 = vadd.f32 %v831, %v964
      %966 = vmatmul.f32.gmra.mxu0 %v855
      %v967 = vpop.f32.mrf.mxu0
      %v968 = vadd.f32 %v831, %v967
      %969 = vmatmul.f32.gmra.mxu0 %v858
      %v970 = vpop.f32.mrf.mxu0
      %v971 = vadd.f32 %v831, %v970
      %972 = vmatmul.f32.gmra.mxu0 %v861
      %v973 = vpop.f32.mrf.mxu0
      %v974 = vadd.f32 %v831, %v973
      %975 = vmatmul.f32.gmra.mxu0 %v864
      %v976 = vpop.f32.mrf.mxu0
      %v977 = vadd.f32 %v831, %v976
      %978 = vmatmul.f32.gmra.mxu0 %v867
      %v979 = vpop.f32.mrf.mxu0
      %v980 = vadd.f32 %v831, %v979
      %981 = vmatmul.f32.gmra.mxu0 %v870
      %v982 = vpop.f32.mrf.mxu0
      %v983 = vadd.f32 %v831, %v982
      %984 = vmatmul.f32.gmra.mxu0 %v873
      %v985 = vpop.f32.mrf.mxu0
      %v986 = vadd.f32 %v831, %v985
      %987 = vmatmul.f32.gmra.mxu0 %v876
      %v988 = vpop.f32.mrf.mxu0
      %v989 = vadd.f32 %v831, %v988
      %990 = vmatmul.f32.gmra.mxu0 %v879
      %v991 = vpop.f32.mrf.mxu0
      %v992 = vadd.f32 %v831, %v991
      %993 = vmatmul.f32.gmra.mxu0 %v882
      %v994 = vpop.f32.mrf.mxu0
      %v995 = vadd.f32 %v831, %v994
      %996 = vmatmul.f32.gmra.mxu0 %v885
      %v997 = vpop.f32.mrf.mxu0
      %v998 = vadd.f32 %v831, %v997
      %999 = vmatmul.f32.gmra.mxu0 %v888
      %v1000 = vpop.f32.mrf.mxu0
      %v1001 = vadd.f32 %v831, %v1000
      %1002 = vmatmul.f32.gmra.mxu0 %v891
      %v1003 = vpop.f32.mrf.mxu0
      %v1004 = vadd.f32 %v831, %v1003
      %1005 = vmatmul.f32.gmra.mxu0 %v894
      %v1006 = vpop.f32.mrf.mxu0
      %v1007 = vadd.f32 %v831, %v1006
      %1008 = vmatmul.f32.gmra.mxu0 %v897
      %v1009 = vpop.f32.mrf.mxu0
      %v1010 = vadd.f32 %v831, %v1009
      %1011 = vmatmul.f32.gmra.mxu0 %v900
      %v1012 = vpop.f32.mrf.mxu0
      %v1013 = vadd.f32 %v831, %v1012
      %1014 = vmatmul.f32.gmra.mxu0 %v903
      %v1015 = vpop.f32.mrf.mxu0
      %v1016 = vadd.f32 %v831, %v1015
      %1017 = vmatmul.f32.gmra.mxu0 %v906
      %v1018 = vpop.f32.mrf.mxu0
      %v1019 = vadd.f32 %v831, %v1018
      %1020 = vmatmul.f32.gmra.mxu0 %v909
      %v1021 = vpop.f32.mrf.mxu0
      %v1022 = vadd.f32 %v831, %v1021
      %1023 = vmatmul.f32.gmra.mxu0 %v912
      %v1024 = vpop.f32.mrf.mxu0
      %v1025 = vadd.f32 %v831, %v1024
      %1026 = vmatmul.f32.gmra.mxu0 %v915
      %v1027 = vpop.f32.mrf.mxu0
      %v1028 = vadd.f32 %v831, %v1027
      %1029 = vmatmul.f32.gmra.mxu0 %v918
      %v1030 = vpop.f32.mrf.mxu0
      %v1031 = vadd.f32 %v831, %v1030
      %1032 = vmatmul.f32.gmra.mxu0 %v921
      %v1033 = vpop.f32.mrf.mxu0
      %v1034 = vadd.f32 %v831, %v1033
      %1035 = vmatmul.f32.gmra.mxu0 %v924
      %v1036 = vpop.f32.mrf.mxu0
      %v1037 = vadd.f32 %v831, %v1036
      %1038 = vmatmul.f32.gmra.mxu0 %v927
      %v1039 = vpop.f32.mrf.mxu0
      %v1040 = vadd.f32 %v831, %v1039
      %1041 = vdwg.mxu0
      %1042 = vst.msk [vmem:[%s280] sm:$0xff] %vm326, %v947
      %1043 = vst.msk [vmem:[%s280 + $0x8] sm:$0xff] %vm326, %v950
      %1044 = vst.msk [vmem:[%s280 + $0x10] sm:$0xff] %vm326, %v953
      %1045 = vst.msk [vmem:[%s280 + $0x18] sm:$0xff] %vm326, %v956
      %1046 = vst.msk [vmem:[%s280 + $0x20] sm:$0xff] %vm326, %v959
      %1047 = vst.msk [vmem:[%s280 + $0x28] sm:$0xff] %vm326, %v962
      %1048 = vst.msk [vmem:[%s280 + $0x30] sm:$0xff] %vm326, %v965
      %1049 = vst.msk [vmem:[%s280 + $0x38] sm:$0xff] %vm326, %v968
      %1050 = vst.msk [vmem:[%s280 + $0x40] sm:$0xff] %vm326, %v971
      %1051 = vst.msk [vmem:[%s280 + $0x48] sm:$0xff] %vm326, %v974
      %1052 = vst.msk [vmem:[%s280 + $0x50] sm:$0xff] %vm326, %v977
      %1053 = vst.msk [vmem:[%s280 + $0x58] sm:$0xff] %vm326, %v980
      %1054 = vst.msk [vmem:[%s280 + $0x60] sm:$0xff] %vm326, %v983
      %1055 = vst.msk [vmem:[%s280 + $0x68] sm:$0xff] %vm326, %v986
      %1056 = vst.msk [vmem:[%s280 + $0x70] sm:$0xff] %vm326, %v989
      %1057 = vst.msk [vmem:[%s280 + $0x78] sm:$0xff] %vm326, %v992
      %1058 = vst.msk [vmem:[%s280 + $0x80] sm:$0xff] %vm326, %v995
      %1059 = vst.msk [vmem:[%s280 + $0x88] sm:$0xff] %vm326, %v998
      %1060 = vst.msk [vmem:[%s280 + $0x90] sm:$0xff] %vm326, %v1001
      %1061 = vst.msk [vmem:[%s280 + $0x98] sm:$0xff] %vm326, %v1004
      %1062 = vst.msk [vmem:[%s280 + $0xa0] sm:$0xff] %vm326, %v1007
      %1063 = vst.msk [vmem:[%s280 + $0xa8] sm:$0xff] %vm326, %v1010
      %1064 = vst.msk [vmem:[%s280 + $0xb0] sm:$0xff] %vm326, %v1013
      %1065 = vst.msk [vmem:[%s280 + $0xb8] sm:$0xff] %vm326, %v1016
      %1066 = vst.msk [vmem:[%s280 + $0xc0] sm:$0xff] %vm326, %v1019
      %1067 = vst.msk [vmem:[%s280 + $0xc8] sm:$0xff] %vm326, %v1022
      %1068 = vst.msk [vmem:[%s280 + $0xd0] sm:$0xff] %vm326, %v1025
      %1069 = vst.msk [vmem:[%s280 + $0xd8] sm:$0xff] %vm326, %v1028
      %1070 = vst.msk [vmem:[%s280 + $0xe0] sm:$0xff] %vm326, %v1031
      %1071 = vst.msk [vmem:[%s280 + $0xe8] sm:$0xff] %vm326, %v1034
      %1072 = vst.msk [vmem:[%s280 + $0xf0] sm:$0xff] %vm326, %v1037
      %1073 = vst.msk [vmem:[%s280 + $0xf8] sm:$0xff] %vm326, %v1040
      %s1074 = smul.u32 32, %s18
      %p1075 = scmp.lt.s32.totalorder %s1074, 127
      %s1076 = scalar_select %p1075, %s1074, 127
      %s1077 = smul.addr %s1076, 8
      %s1078 = scalar_lea.vmem %s7, %s1077
      // Predicated region
      $region49: #{tpu_custom_call.1} parent=47 // pred_check
        %p1079 = pneg %p188
      $region50: #{tpu_custom_call.1} parent=47 // pred_check_branch
        %1081 = sbr.rel (%p1079) target = $region52
      $region51: #{tpu_custom_call.1} parent=47 // pred_region
        %s1082 = smul.u32 32, %s18
      $region52: #{tpu_custom_call.1} parent=47 // pred_fallthru
        _
    $region48: #{tpu_custom_call.1} parent=5 // pred_fallthru
      _
    %p1083 = scmp.le.s32.totalorder 2, %s13
    // Predicated region
    $region53: #{tpu_custom_call.1} parent=5 // pred_check
      %p1084 = pneg %p1083
    $region54: #{tpu_custom_call.1} parent=5 // pred_check_branch
      %1086 = sbr.rel (%p1084) target = $region56
    $region55: #{tpu_custom_call.1} parent=5 // pred_region
      %s1087 = ssub.s32 %s13, 2
      // Predicated region
      $region57: #{tpu_custom_call.1} parent=55 // pred_check
        %p1088 = pneg %p194
      $region58: #{tpu_custom_call.1} parent=55 // pred_check_branch
        %1090 = sbr.rel (%p1088) target = $region60
      $region59: #{tpu_custom_call.1} parent=55 // pred_region
        %s1091 = smul.u32 32, %s19
        %p1092 = scmp.lt.s32.totalorder %s1091, 127
        %s1093 = scalar_select %p1092, %s1091, 127
        %s1094 = smul.addr %s1093, 8
        %s1095 = scalar_lea.vmem %s7, %s1094
      $region60: #{tpu_custom_call.1} parent=55 // pred_fallthru
        _
    $region56: #{tpu_custom_call.1} parent=5 // pred_fallthru
      _
  $region6: #{tpu_custom_call.1} parent=0 // loop_footer
    %s17 = sadd.s32 1, %s13
  $region7: #{tpu_custom_call.1} parent=0 // loop_footer_branch
    %12 = sbr.rel target = $region3
  $region8: #{tpu_custom_call.1} parent=0 // loop_exit
    _

</llo_original>
